<compile_context>
chip_gen: v7x
topology: tpu7x:2x2x1
jax: 0.10.0
libtpu: 0.0.40
codegen_flags: <defaults>
</compile_context>

<pallas_src>
import math

import jax
import jax.numpy as jnp
from jax.experimental import pallas as pl
from jax.experimental.pallas import tpu as pltpu


def _round_up(x, m):
    return ((x + m - 1) // m) * m


def _fusion3_kernel(x1_ref, x2_ref, x3_ref, w_ref, b_ref, o_ref):
    # y_tile = x1 @ Wa + x2 @ Wb + x3 @ Wc + b   (f32 accumulate on the MXU)
    acc = jnp.dot(x1_ref[...], w_ref[0], preferred_element_type=jnp.float32)
    acc = acc + jnp.dot(x2_ref[...], w_ref[1], preferred_element_type=jnp.float32)
    acc = acc + jnp.dot(x3_ref[...], w_ref[2], preferred_element_type=jnp.float32)
    acc = acc + b_ref[...].astype(jnp.float32)
    o_ref[...] = acc.astype(o_ref.dtype)


def prepare_fusion3_params(weight, bias, param_dtype=None):
    """Fold the torch-convention (D, 6D) Linear weight into a (3, D, D) stack.

    cat([x1, x2, x3, x1-x2, x1-x3, x2-x3]) @ W.T
        == x1 @ (W1+W4+W5) + x2 @ (W2-W4+W6) + x3 @ (W3-W5-W6)
    Call this once at parameter-load time (amortized to zero per forward).
    """
    D = weight.shape[0]
    w6 = jnp.transpose(weight).reshape(6, D, D)
    w_eff = jnp.stack(
        [
            w6[0] + w6[3] + w6[4],  # multiplies x1
            w6[1] - w6[3] + w6[5],  # multiplies x2
            w6[2] - w6[4] - w6[5],  # multiplies x3
        ]
    )
    if param_dtype is not None:
        w_eff = w_eff.astype(param_dtype)  # e.g. bf16 for the MXU fast path
    return w_eff, bias


def fusion3_minus_fc(x1, x2, x3, w_eff, bias, *, tm=512, tn=256):
    """x1/x2/x3: (..., D). w_eff: (3, D, D) from prepare_fusion3_params. bias: (D,)."""
    orig_shape = x1.shape
    D = orig_shape[-1]
    M = math.prod(orig_shape[:-1])
    out_dtype = x1.dtype

    # Lane-dense output: pad hidden dim to a multiple of 128.
    Dp = _round_up(D, 128)
    tn = min(tn, Dp)
    # Row tile: large, 8-aligned, but no bigger than the (padded) row count.
    tm = min(tm, _round_up(M, 8))
    Mp = _round_up(M, tm)

    def _prep(x):
        xf = x.reshape(M, D)
        if Mp != M or Dp != D:
            xf = jnp.pad(xf, ((0, Mp - M), (0, Dp - D)))
        return xf

    x1f, x2f, x3f = _prep(x1), _prep(x2), _prep(x3)

    if Dp != D:
        # Zero-padded input rows/cols contribute nothing; padded output cols
        # are sliced off below.
        w_eff = jnp.pad(w_eff, ((0, 0), (0, Dp - D), (0, Dp - D)))
        bias = jnp.pad(bias, (0, Dp - D))
    b2 = bias.reshape(1, Dp)

    grid = (Mp // tm, Dp // tn)

    # Double-buffered footprint estimate -> raise scoped VMEM only as needed,
    # capped at 64 MiB so it stays valid on v7x.
    in_b = jnp.dtype(x1f.dtype).itemsize
    w_b = jnp.dtype(w_eff.dtype).itemsize
    o_b = jnp.dtype(out_dtype).itemsize
    est = 2 * (3 * tm * Dp * in_b + 3 * Dp * tn * w_b + tn * 4 + tm * tn * o_b)
    vmem_limit = int(min(max(32 * 1024 * 1024, 2 * est), 64 * 1024 * 1024))

    out = pl.pallas_call(
        _fusion3_kernel,
        out_shape=jax.ShapeDtypeStruct((Mp, Dp), out_dtype),
        grid_spec=pltpu.PrefetchScalarGridSpec(
            num_scalar_prefetch=0,
            grid=grid,
            in_specs=[
                pl.BlockSpec((tm, Dp), lambda i, j: (i, 0)),
                pl.BlockSpec((tm, Dp), lambda i, j: (i, 0)),
                pl.BlockSpec((tm, Dp), lambda i, j: (i, 0)),
                # Weight stripe depends only on the column index -> stays
                # resident across the row axis.
                pl.BlockSpec((3, Dp, tn), lambda i, j: (0, 0, j)),
                pl.BlockSpec((1, tn), lambda i, j: (0, j)),
            ],
            out_specs=pl.BlockSpec((tm, tn), lambda i, j: (i, j)),
        ),
        compiler_params=pltpu.CompilerParams(
            dimension_semantics=("parallel", "parallel"),
            vmem_limit_bytes=vmem_limit,
        ),
    )(x1f, x2f, x3f, w_eff, b2)

    return out[:M, :D].reshape(orig_shape)


def _reference(x1, x2, x3, weight, bias):
    cat = jnp.concatenate([x1, x2, x3, x1 - x2, x1 - x3, x2 - x3], axis=-1)
    return cat @ weight.T + bias


if __name__ == "__main__":
    B, S, D = 2, 8, 32  # batch, seq, hidden (input_dim = 32)

    key = jax.random.PRNGKey(0)
    k1, k2, k3, kw, kb = jax.random.split(key, 5)

    x1 = jax.random.normal(k1, (B, S, D), dtype=jnp.float32)
    x2 = jax.random.normal(k2, (B, S, D), dtype=jnp.float32)
    x3 = jax.random.normal(k3, (B, S, D), dtype=jnp.float32)

    # Deterministic nn.Linear(6*D, D)-shaped parameters (torch convention).
    bound = 1.0 / math.sqrt(6 * D)
    weight = jax.random.uniform(kw, (D, 6 * D), jnp.float32, -bound, bound)
    bias = jax.random.uniform(kb, (D,), jnp.float32, -bound, bound)

    # Fold once at "parameter load" time, outside the hot path.
    w_eff, b_eff = prepare_fusion3_params(weight, bias)

    out = fusion3_minus_fc(x1, x2, x3, w_eff, b_eff)
    out = jax.block_until_ready(out)

    ref = _reference(x1, x2, x3, weight, bias)
    assert out.shape == ref.shape
    err = float(jnp.max(jnp.abs(out - ref)))
    assert err < 1e-4, f"mismatch vs reference: {err}"

    print("KERNEL_OK")
</pallas_src>

<mosaic_0001>
module attributes {stable_mosaic.version = 11 : i64} {
  func.func @_fusion3_kernel(%arg0: i32, %arg1: i32, %arg2: memref<16x128xf32, #tpu.memory_space<vmem>>, %arg3: memref<16x128xf32, #tpu.memory_space<vmem>>, %arg4: memref<16x128xf32, #tpu.memory_space<vmem>>, %arg5: memref<3x128x128xf32, #tpu.memory_space<vmem>>, %arg6: memref<1x128xf32, #tpu.memory_space<vmem>>, %arg7: memref<16x128xf32, #tpu.memory_space<vmem>>) attributes {dimension_semantics = [#tpu.dimension_semantics<parallel>, #tpu.dimension_semantics<parallel>], iteration_bounds = array<i64: 1, 1>, scalar_prefetch = 0 : i64, scratch_operands = 0 : i64, tpu.core_type = #tpu.core_type<tc>, window_params = [{transform_indices = @transform_0, window_bounds = array<i64: 16, 128>}, {transform_indices = @transform_1, window_bounds = array<i64: 16, 128>}, {transform_indices = @transform_2, window_bounds = array<i64: 16, 128>}, {transform_indices = @transform_3, window_bounds = array<i64: 3, 128, 128>}, {transform_indices = @transform_4, window_bounds = array<i64: 1, 128>}, {transform_indices = @transform_5, window_bounds = array<i64: 16, 128>}]} {
    %c0 = arith.constant 0 : index
    %c0_0 = arith.constant 0 : index
    %0 = vector.load %arg2[%c0, %c0_0] : memref<16x128xf32, #tpu.memory_space<vmem>>, vector<16x128xf32>
    %c0_1 = arith.constant 0 : index
    %c0_2 = arith.constant 0 : index
    %c0_3 = arith.constant 0 : index
    %1 = vector.load %arg5[%c0_1, %c0_2, %c0_3] : memref<3x128x128xf32, #tpu.memory_space<vmem>>, vector<1x128x128xf32>
    %2 = vector.shape_cast %1 : vector<1x128x128xf32> to vector<128x128xf32>
    %cst = arith.constant dense<0.000000e+00> : vector<16x128xf32>
    %3 = tpu.matmul %0, %2, %cst {dimension_numbers = #tpu.dot_dimension_numbers<[1], [0], [0], [1], [0, 0, 1, 1], [], []>} : vector<16x128xf32>, vector<128x128xf32>, vector<16x128xf32> -> vector<16x128xf32>
    %c0_4 = arith.constant 0 : index
    %c0_5 = arith.constant 0 : index
    %4 = vector.load %arg3[%c0_4, %c0_5] : memref<16x128xf32, #tpu.memory_space<vmem>>, vector<16x128xf32>
    %c1 = arith.constant 1 : index
    %c0_6 = arith.constant 0 : index
    %c0_7 = arith.constant 0 : index
    %5 = vector.load %arg5[%c1, %c0_6, %c0_7] : memref<3x128x128xf32, #tpu.memory_space<vmem>>, vector<1x128x128xf32>
    %6 = vector.shape_cast %5 : vector<1x128x128xf32> to vector<128x128xf32>
    %cst_8 = arith.constant dense<0.000000e+00> : vector<16x128xf32>
    %7 = tpu.matmul %4, %6, %cst_8 {dimension_numbers = #tpu.dot_dimension_numbers<[1], [0], [0], [1], [0, 0, 1, 1], [], []>} : vector<16x128xf32>, vector<128x128xf32>, vector<16x128xf32> -> vector<16x128xf32>
    %8 = arith.addf %3, %7 : vector<16x128xf32>
    %c0_9 = arith.constant 0 : index
    %c0_10 = arith.constant 0 : index
    %9 = vector.load %arg4[%c0_9, %c0_10] : memref<16x128xf32, #tpu.memory_space<vmem>>, vector<16x128xf32>
    %c2 = arith.constant 2 : index
    %c0_11 = arith.constant 0 : index
    %c0_12 = arith.constant 0 : index
    %10 = vector.load %arg5[%c2, %c0_11, %c0_12] : memref<3x128x128xf32, #tpu.memory_space<vmem>>, vector<1x128x128xf32>
    %11 = vector.shape_cast %10 : vector<1x128x128xf32> to vector<128x128xf32>
    %cst_13 = arith.constant dense<0.000000e+00> : vector<16x128xf32>
    %12 = tpu.matmul %9, %11, %cst_13 {dimension_numbers = #tpu.dot_dimension_numbers<[1], [0], [0], [1], [0, 0, 1, 1], [], []>} : vector<16x128xf32>, vector<128x128xf32>, vector<16x128xf32> -> vector<16x128xf32>
    %13 = arith.addf %8, %12 : vector<16x128xf32>
    %c0_14 = arith.constant 0 : index
    %c0_15 = arith.constant 0 : index
    %14 = vector.load %arg6[%c0_14, %c0_15] : memref<1x128xf32, #tpu.memory_space<vmem>>, vector<1x128xf32>
    %15 = vector.broadcast %14 : vector<1x128xf32> to vector<16x128xf32>
    %16 = arith.addf %13, %15 : vector<16x128xf32>
    %c0_16 = arith.constant 0 : index
    %c0_17 = arith.constant 0 : index
    %17 = vector.load %arg7[%c0_16, %c0_17] : memref<16x128xf32, #tpu.memory_space<vmem>>, vector<16x128xf32>
    tpu.vector_store %arg7[%c0_16, %c0_17], %16 {strides = array<i32>} : memref<16x128xf32, #tpu.memory_space<vmem>>, vector<16x128xf32>,
    return
  }
  func.func @transform_0(%arg0: i32, %arg1: i32) -> (i32, i32) {
    %c0_i32 = arith.constant 0 : i32
    %c0_i32_0 = arith.constant 0 : i32
    return %arg0, %c0_i32 : i32, i32
  }
  func.func @transform_1(%arg0: i32, %arg1: i32) -> (i32, i32) {
    %c0_i32 = arith.constant 0 : i32
    %c0_i32_0 = arith.constant 0 : i32
    return %arg0, %c0_i32 : i32, i32
  }
  func.func @transform_2(%arg0: i32, %arg1: i32) -> (i32, i32) {
    %c0_i32 = arith.constant 0 : i32
    %c0_i32_0 = arith.constant 0 : i32
    return %arg0, %c0_i32 : i32, i32
  }
  func.func @transform_3(%arg0: i32, %arg1: i32) -> (i32, i32, i32) {
    %c0_i32 = arith.constant 0 : i32
    %c0_i32_0 = arith.constant 0 : i32
    %c0_i32_1 = arith.constant 0 : i32
    return %c0_i32, %c0_i32_0, %arg1 : i32, i32, i32
  }
  func.func @transform_4(%arg0: i32, %arg1: i32) -> (i32, i32) {
    %c0_i32 = arith.constant 0 : i32
    %c0_i32_0 = arith.constant 0 : i32
    return %c0_i32, %arg1 : i32, i32
  }
  func.func @transform_5(%arg0: i32, %arg1: i32) -> (i32, i32) {
    %c0_i32 = arith.constant 0 : i32
    return %arg0, %arg1 : i32, i32
  }
}

</mosaic_0001>

<llo_original>
// kernel: tpu_custom_call.1
$region0: #{tpu_custom_call.1}
  #allocation0 [shape = 'u32[]', space=smem, size = 0x4, offset = 0x4, fixed_abs, tag = 'smem constant byte address 0x4 - core index']
  #allocation1 [shape = 'u32[144,128]{1,0:T(1,128)}', space=vmem, size = 0x12000, scoped, tag = 'internal scratch']
  %s0 = inlined_call_operand.hbm [shape: f32[16,128], index: 0, kind: input, shape index: {}]
  %s1 = inlined_call_operand.hbm [shape: f32[16,128], index: 1, kind: input, shape index: {}]
  %s2 = inlined_call_operand.hbm [shape: f32[16,128], index: 2, kind: input, shape index: {}]
  %s3 = inlined_call_operand.hbm [shape: f32[3,128,128], index: 3, kind: input, shape index: {}]
  %s4 = inlined_call_operand.vmem [shape: f32[1,128], index: 4, kind: input, shape index: {}]
  %s5 = inlined_call_operand.hbm [shape: f32[16,128], index: 5, kind: output, shape index: {}]
  %s6 = sld [smem:[#allocation0]]
  $region46: #{tpu_custom_call.1} parent=0
    _
  %s8 = ssub.s32 1, %s6
  %s9 = scalar_select 0, %s8, %s6
  $region1: #{tpu_custom_call.1} parent=0
    #allocation2 [shape = 'u8[8192]{0}', space=vmem, size = 0x2000, scoped, tag = 'input window, operand 0, single buffered']
    #allocation3 [shape = 's32[1]{0}', space=sflag, size = 0x4, scoped, tag = 'scoped memory for tpu_custom_call.1']
    #allocation4 [shape = 's32[1]{0}', space=sflag, size = 0x4, scoped, tag = 'scoped memory for tpu_custom_call.1']
    #allocation5 [shape = 'u8[8192]{0}', space=vmem, size = 0x2000, scoped, tag = 'input window, operand 1, single buffered']
    #allocation6 [shape = 's32[1]{0}', space=sflag, size = 0x4, scoped, tag = 'scoped memory for tpu_custom_call.1']
    #allocation7 [shape = 'u8[8192]{0}', space=vmem, size = 0x2000, scoped, tag = 'input window, operand 2, single buffered']
    #allocation8 [shape = 'u8[196608]{0}', space=vmem, size = 0x30000, scoped, tag = 'input window, operand 3, single buffered']
    #allocation9 [shape = 's32[1]{0}', space=sflag, size = 0x4, scoped, tag = 'scoped memory for tpu_custom_call.1']
    #allocation10 [shape = 'u8[8192]{0}', space=vmem, size = 0x2000, scoped, tag = 'output window, operand 0, single buffered']
    %10 = vsyncpa [#allocation3], 0
    %11 = vsyncpa [#allocation6], 0
    %12 = vsyncpa [#allocation9], 0
    %13 = vsyncpa [#allocation4], 0
    // Predicated region
    $region2: #{tpu_custom_call.1} parent=1 // pred_check
      _
    $region3: #{tpu_custom_call.1} parent=1 // pred_check_branch
      %15 = sbr.rel (0) target = $region5
    $region4: #{tpu_custom_call.1} parent=1 // pred_region
      %s17 = ssub.s32 256, 256
      %18 = vsyncadd [#allocation3], %s17
      %s19 = sshll.u32 [#allocation2], 4
      %s20 = int_to_ptr.vmem [resolvable:$true] %s19
      %25 = dma.hbm_to_vmem [thread:$0]  %s0, 256, %s20, [#allocation3], 128, 128, 8
    $region5: #{tpu_custom_call.1} parent=1 // pred_fallthru
      _
    // Predicated region
    $region6: #{tpu_custom_call.1} parent=1 // pred_check
      _
    $region7: #{tpu_custom_call.1} parent=1 // pred_check_branch
      %27 = sbr.rel (0) target = $region9
    $region8: #{tpu_custom_call.1} parent=1 // pred_region
      %s29 = ssub.s32 256, 256
      %30 = vsyncadd [#allocation6], %s29
      %s31 = sshll.u32 [#allocation5], 4
      %s32 = int_to_ptr.vmem [resolvable:$true] %s31
      %37 = dma.hbm_to_vmem [thread:$0]  %s1, 256, %s32, [#allocation6], 128, 128, 8
    $region9: #{tpu_custom_call.1} parent=1 // pred_fallthru
      _
    // Predicated region
    $region10: #{tpu_custom_call.1} parent=1 // pred_check
      _
    $region11: #{tpu_custom_call.1} parent=1 // pred_check_branch
      %39 = sbr.rel (0) target = $region13
    $region12: #{tpu_custom_call.1} parent=1 // pred_region
      %s41 = ssub.s32 256, 256
      %42 = vsyncadd [#allocation6], %s41
      %s43 = sshll.u32 [#allocation7], 4
      %s44 = int_to_ptr.vmem [resolvable:$true] %s43
      %49 = dma.hbm_to_vmem [thread:$0]  %s2, 256, %s44, [#allocation6], 128, 128, 8
    $region13: #{tpu_custom_call.1} parent=1 // pred_fallthru
      _
    // Predicated region
    $region14: #{tpu_custom_call.1} parent=1 // pred_check
      _
    $region15: #{tpu_custom_call.1} parent=1 // pred_check_branch
      %51 = sbr.rel (0) target = $region17
    $region16: #{tpu_custom_call.1} parent=1 // pred_region
      %s53 = ssub.s32 6144, 6144
      %54 = vsyncadd [#allocation9], %s53
      %s55 = sshll.u32 [#allocation8], 4
      %s56 = int_to_ptr.vmem [resolvable:$true] %s55
      %61 = dma.hbm_to_vmem [thread:$0]  %s3, 6144, %s56, [#allocation9], 128, 128, 8
    $region17: #{tpu_custom_call.1} parent=1 // pred_fallthru
      _
    // Predicated region
    $region18: #{tpu_custom_call.1} parent=1 // pred_check
      _
    $region19: #{tpu_custom_call.1} parent=1 // pred_check_branch
      %63 = sbr.rel (0) target = $region21
    $region20: #{tpu_custom_call.1} parent=1 // pred_region
      _
    $region21: #{tpu_custom_call.1} parent=1 // pred_fallthru
      _
    // Predicated region
    $region22: #{tpu_custom_call.1} parent=1 // pred_check
      _
    $region23: #{tpu_custom_call.1} parent=1 // pred_check_branch
      %65 = sbr.rel (0) target = $region25
    $region24: #{tpu_custom_call.1} parent=1 // pred_region
      %66 = dma.done [#allocation3], 256
    $region25: #{tpu_custom_call.1} parent=1 // pred_fallthru
      _
    // Predicated region
    $region26: #{tpu_custom_call.1} parent=1 // pred_check
      _
    $region27: #{tpu_custom_call.1} parent=1 // pred_check_branch
      %68 = sbr.rel (0) target = $region29
    $region28: #{tpu_custom_call.1} parent=1 // pred_region
      %69 = dma.done [#allocation6], 256
    $region29: #{tpu_custom_call.1} parent=1 // pred_fallthru
      _
    // Predicated region
    $region30: #{tpu_custom_call.1} parent=1 // pred_check
      _
    $region31: #{tpu_custom_call.1} parent=1 // pred_check_branch
      %71 = sbr.rel (0) target = $region33
    $region32: #{tpu_custom_call.1} parent=1 // pred_region
      %72 = dma.done [#allocation6], 256
    $region33: #{tpu_custom_call.1} parent=1 // pred_fallthru
      _
    // Predicated region
    $region34: #{tpu_custom_call.1} parent=1 // pred_check
      _
    $region35: #{tpu_custom_call.1} parent=1 // pred_check_branch
      %74 = sbr.rel (0) target = $region37
    $region36: #{tpu_custom_call.1} parent=1 // pred_region
      %75 = dma.done [#allocation9], 6144
    $region37: #{tpu_custom_call.1} parent=1 // pred_fallthru
      _
    %v76 = vld [vmem:[#allocation2] sm:$0xff]
    %v77 = vld [vmem:[#allocation2 + $0x8] sm:$0xff]
    %v78 = vld [vmem:[#allocation8] sm:$0xff]
    %v79 = vld [vmem:[#allocation8 + $0x8] sm:$0xff]
    %v80 = vld [vmem:[#allocation8 + $0x10] sm:$0xff]
    %v81 = vld [vmem:[#allocation8 + $0x18] sm:$0xff]
    %v82 = vld [vmem:[#allocation8 + $0x20] sm:$0xff]
    %v83 = vld [vmem:[#allocation8 + $0x28] sm:$0xff]
    %v84 = vld [vmem:[#allocation8 + $0x30] sm:$0xff]
    %v85 = vld [vmem:[#allocation8 + $0x38] sm:$0xff]
    %v86 = vld [vmem:[#allocation8 + $0x40] sm:$0xff]
    %v87 = vld [vmem:[#allocation8 + $0x48] sm:$0xff]
    %v88 = vld [vmem:[#allocation8 + $0x50] sm:$0xff]
    %v89 = vld [vmem:[#allocation8 + $0x58] sm:$0xff]
    %v90 = vld [vmem:[#allocation8 + $0x60] sm:$0xff]
    %v91 = vld [vmem:[#allocation8 + $0x68] sm:$0xff]
    %v92 = vld [vmem:[#allocation8 + $0x70] sm:$0xff]
    %v93 = vld [vmem:[#allocation8 + $0x78] sm:$0xff]
    %v94 = vld [vmem:[#allocation5] sm:$0xff]
    %v95 = vld [vmem:[#allocation5 + $0x8] sm:$0xff]
    %s96 = scalar_lea.vmem [#allocation8], 128
    %v97 = vld [vmem:[%s96] sm:$0xff]
    %v98 = vld [vmem:[%s96 + $0x8] sm:$0xff]
    %v99 = vld [vmem:[%s96 + $0x10] sm:$0xff]
    %v100 = vld [vmem:[%s96 + $0x18] sm:$0xff]
    %v101 = vld [vmem:[%s96 + $0x20] sm:$0xff]
    %v102 = vld [vmem:[%s96 + $0x28] sm:$0xff]
    %v103 = vld [vmem:[%s96 + $0x30] sm:$0xff]
    %v104 = vld [vmem:[%s96 + $0x38] sm:$0xff]
    %v105 = vld [vmem:[%s96 + $0x40] sm:$0xff]
    %v106 = vld [vmem:[%s96 + $0x48] sm:$0xff]
    %v107 = vld [vmem:[%s96 + $0x50] sm:$0xff]
    %v108 = vld [vmem:[%s96 + $0x58] sm:$0xff]
    %v109 = vld [vmem:[%s96 + $0x60] sm:$0xff]
    %v110 = vld [vmem:[%s96 + $0x68] sm:$0xff]
    %v111 = vld [vmem:[%s96 + $0x70] sm:$0xff]
    %v112 = vld [vmem:[%s96 + $0x78] sm:$0xff]
    %113 = vmatprep.subr.mxu0 0.0
    %114 = vmatpush1.msra.mxu0 %v97
    %115 = vmatprep.subr.mxu0 0.0
    %116 = vmatpush1.msra.mxu0 %v98
    %117 = vmatprep.subr.mxu0 0.0
    %118 = vmatpush1.msra.mxu0 %v99
    %119 = vmatprep.subr.mxu0 0.0
    %120 = vmatpush1.msra.mxu0 %v100
    %121 = vmatprep.subr.mxu0 0.0
    %122 = vmatpush1.msra.mxu0 %v101
    %123 = vmatprep.subr.mxu0 0.0
    %124 = vmatpush1.msra.mxu0 %v102
    %125 = vmatprep.subr.mxu0 0.0
    %126 = vmatpush1.msra.mxu0 %v103
    %127 = vmatprep.subr.mxu0 0.0
    %128 = vmatpush1.msra.mxu0 %v104
    %129 = vmatprep.subr.mxu0 0.0
    %130 = vmatpush1.msra.mxu0 %v105
    %131 = vmatprep.subr.mxu0 0.0
    %132 = vmatpush1.msra.mxu0 %v106
    %133 = vmatprep.subr.mxu0 0.0
    %134 = vmatpush1.msra.mxu0 %v107
    %135 = vmatprep.subr.mxu0 0.0
    %136 = vmatpush1.msra.mxu0 %v108
    %137 = vmatprep.subr.mxu0 0.0
    %138 = vmatpush1.msra.mxu0 %v109
    %139 = vmatprep.subr.mxu0 0.0
    %140 = vmatpush1.msra.mxu0 %v110
    %141 = vmatprep.subr.mxu0 0.0
    %142 = vmatpush1.msra.mxu0 %v111
    %143 = vmatprep.subr.mxu0 0.0
    %144 = vmatpush1.msra.mxu0 %v112
    %145 = vmatprep.subr.mxu0 0.0
    %146 = vmatpush1.msra.mxu0 0.0
    %147 = vmatprep.subr.mxu0 0.0
    %148 = vmatpush1.msra.mxu0 0.0
    %149 = vmatprep.subr.mxu0 0.0
    %150 = vmatpush1.msra.mxu0 0.0
    %151 = vmatprep.subr.mxu0 0.0
    %152 = vmatpush1.msra.mxu0 0.0
    %153 = vmatprep.subr.mxu0 0.0
    %154 = vmatpush1.msra.mxu0 0.0
    %155 = vmatprep.subr.mxu0 0.0
    %156 = vmatpush1.msra.mxu0 0.0
    %157 = vmatprep.subr.mxu0 0.0
    %158 = vmatpush1.msra.mxu0 0.0
    %159 = vmatprep.subr.mxu0 0.0
    %160 = vmatpush1.msra.mxu0 0.0
    %161 = vmatprep.subr.mxu0 0.0
    %162 = vmatpush1.msra.mxu0 0.0
    %163 = vmatprep.subr.mxu0 0.0
    %164 = vmatpush1.msra.mxu0 0.0
    %165 = vmatprep.subr.mxu0 0.0
    %166 = vmatpush1.msra.mxu0 0.0
    %167 = vmatprep.subr.mxu0 0.0
    %168 = vmatpush1.msra.mxu0 0.0
    %169 = vmatprep.subr.mxu0 0.0
    %170 = vmatpush1.msra.mxu0 0.0
    %171 = vmatprep.subr.mxu0 0.0
    %172 = vmatpush1.msra.mxu0 0.0
    %173 = vmatprep.subr.mxu0 0.0
    %174 = vmatpush1.msra.mxu0 0.0
    %175 = vmatprep.subr.mxu0 0.0
    %176 = vmatpush1.msra.mxu0 0.0
    %177 = vmatprep.mubr.f32.mxu0 0.0
    %178 = vmatmul.mubr.f32.gmra.mrb[0].mxu0 %v94
    %v179 = vpop.f32.mrb[0].mxu0
    %v180 = vadd.f32 0.0, %v179
    %v181 = vpop.f32.mrb[0].mxu0
    %182 = vmatprep.mubr.f32.mxu0 0.0
    %183 = vmatmul.mubr.f32.gmra.mrb[0].mxu0 %v95
    %v184 = vpop.f32.mrb[0].mxu0
    %v185 = vadd.f32 0.0, %v184
    %v186 = vpop.f32.mrb[0].mxu0
    %187 = vdwg.mxu0
    %188 = vmatprep.subr.mxu0 0.0
    %189 = vmatpush1.msra.mxu0 %v78
    %190 = vmatprep.subr.mxu0 0.0
    %191 = vmatpush1.msra.mxu0 %v79
    %192 = vmatprep.subr.mxu0 0.0
    %193 = vmatpush1.msra.mxu0 %v80
    %194 = vmatprep.subr.mxu0 0.0
    %195 = vmatpush1.msra.mxu0 %v81
    %196 = vmatprep.subr.mxu0 0.0
    %197 = vmatpush1.msra.mxu0 %v82
    %198 = vmatprep.subr.mxu0 0.0
    %199 = vmatpush1.msra.mxu0 %v83
    %200 = vmatprep.subr.mxu0 0.0
    %201 = vmatpush1.msra.mxu0 %v84
    %202 = vmatprep.subr.mxu0 0.0
    %203 = vmatpush1.msra.mxu0 %v85
    %204 = vmatprep.subr.mxu0 0.0
    %205 = vmatpush1.msra.mxu0 %v86
    %206 = vmatprep.subr.mxu0 0.0
    %207 = vmatpush1.msra.mxu0 %v87
    %208 = vmatprep.subr.mxu0 0.0
    %209 = vmatpush1.msra.mxu0 %v88
    %210 = vmatprep.subr.mxu0 0.0
    %211 = vmatpush1.msra.mxu0 %v89
    %212 = vmatprep.subr.mxu0 0.0
    %213 = vmatpush1.msra.mxu0 %v90
    %214 = vmatprep.subr.mxu0 0.0
    %215 = vmatpush1.msra.mxu0 %v91
    %216 = vmatprep.subr.mxu0 0.0
    %217 = vmatpush1.msra.mxu0 %v92
    %218 = vmatprep.subr.mxu0 0.0
    %219 = vmatpush1.msra.mxu0 %v93
    %220 = vmatprep.subr.mxu0 0.0
    %221 = vmatpush1.msra.mxu0 0.0
    %222 = vmatprep.subr.mxu0 0.0
    %223 = vmatpush1.msra.mxu0 0.0
    %224 = vmatprep.subr.mxu0 0.0
    %225 = vmatpush1.msra.mxu0 0.0
    %226 = vmatprep.subr.mxu0 0.0
    %227 = vmatpush1.msra.mxu0 0.0
    %228 = vmatprep.subr.mxu0 0.0
    %229 = vmatpush1.msra.mxu0 0.0
    %230 = vmatprep.subr.mxu0 0.0
    %231 = vmatpush1.msra.mxu0 0.0
    %232 = vmatprep.subr.mxu0 0.0
    %233 = vmatpush1.msra.mxu0 0.0
    %234 = vmatprep.subr.mxu0 0.0
    %235 = vmatpush1.msra.mxu0 0.0
    %236 = vmatprep.subr.mxu0 0.0
    %237 = vmatpush1.msra.mxu0 0.0
    %238 = vmatprep.subr.mxu0 0.0
    %239 = vmatpush1.msra.mxu0 0.0
    %240 = vmatprep.subr.mxu0 0.0
    %241 = vmatpush1.msra.mxu0 0.0
    %242 = vmatprep.subr.mxu0 0.0
    %243 = vmatpush1.msra.mxu0 0.0
    %244 = vmatprep.subr.mxu0 0.0
    %245 = vmatpush1.msra.mxu0 0.0
    %246 = vmatprep.subr.mxu0 0.0
    %247 = vmatpush1.msra.mxu0 0.0
    %248 = vmatprep.subr.mxu0 0.0
    %249 = vmatpush1.msra.mxu0 0.0
    %250 = vmatprep.subr.mxu0 0.0
    %251 = vmatpush1.msra.mxu0 0.0
    %252 = vmatprep.mubr.f32.mxu0 0.0
    %253 = vmatmul.mubr.f32.gmra.mrb[0].mxu0 %v76
    %v254 = vpop.f32.mrb[0].mxu0
    %v255 = vadd.f32 %v180, %v254
    %v256 = vpop.f32.mrb[0].mxu0
    %257 = vmatprep.mubr.f32.mxu0 0.0
    %258 = vmatmul.mubr.f32.gmra.mrb[0].mxu0 %v77
    %v259 = vpop.f32.mrb[0].mxu0
    %v260 = vadd.f32 %v185, %v259
    %v261 = vpop.f32.mrb[0].mxu0
    %262 = vdwg.mxu0
    %v263 = vld [vmem:[#allocation7] sm:$0xff]
    %v264 = vld [vmem:[#allocation7 + $0x8] sm:$0xff]
    %s265 = scalar_lea.vmem [#allocation8], 256
    %v266 = vld [vmem:[%s265] sm:$0xff]
    %v267 = vld [vmem:[%s265 + $0x8] sm:$0xff]
    %v268 = vld [vmem:[%s265 + $0x10] sm:$0xff]
    %v269 = vld [vmem:[%s265 + $0x18] sm:$0xff]
    %v270 = vld [vmem:[%s265 + $0x20] sm:$0xff]
    %v271 = vld [vmem:[%s265 + $0x28] sm:$0xff]
    %v272 = vld [vmem:[%s265 + $0x30] sm:$0xff]
    %v273 = vld [vmem:[%s265 + $0x38] sm:$0xff]
    %v274 = vld [vmem:[%s265 + $0x40] sm:$0xff]
    %v275 = vld [vmem:[%s265 + $0x48] sm:$0xff]
    %v276 = vld [vmem:[%s265 + $0x50] sm:$0xff]
    %v277 = vld [vmem:[%s265 + $0x58] sm:$0xff]
    %v278 = vld [vmem:[%s265 + $0x60] sm:$0xff]
    %v279 = vld [vmem:[%s265 + $0x68] sm:$0xff]
    %v280 = vld [vmem:[%s265 + $0x70] sm:$0xff]
    %v281 = vld [vmem:[%s265 + $0x78] sm:$0xff]
    %282 = vmatprep.subr.mxu0 0.0
    %283 = vmatpush1.msra.mxu0 %v266
    %284 = vmatprep.subr.mxu0 0.0
    %285 = vmatpush1.msra.mxu0 %v267
    %286 = vmatprep.subr.mxu0 0.0
    %287 = vmatpush1.msra.mxu0 %v268
    %288 = vmatprep.subr.mxu0 0.0
    %289 = vmatpush1.msra.mxu0 %v269
    %290 = vmatprep.subr.mxu0 0.0
    %291 = vmatpush1.msra.mxu0 %v270
    %292 = vmatprep.subr.mxu0 0.0
    %293 = vmatpush1.msra.mxu0 %v271
    %294 = vmatprep.subr.mxu0 0.0
    %295 = vmatpush1.msra.mxu0 %v272
    %296 = vmatprep.subr.mxu0 0.0
    %297 = vmatpush1.msra.mxu0 %v273
    %298 = vmatprep.subr.mxu0 0.0
    %299 = vmatpush1.msra.mxu0 %v274
    %300 = vmatprep.subr.mxu0 0.0
    %301 = vmatpush1.msra.mxu0 %v275
    %302 = vmatprep.subr.mxu0 0.0
    %303 = vmatpush1.msra.mxu0 %v276
    %304 = vmatprep.subr.mxu0 0.0
    %305 = vmatpush1.msra.mxu0 %v277
    %306 = vmatprep.subr.mxu0 0.0
    %307 = vmatpush1.msra.mxu0 %v278
    %308 = vmatprep.subr.mxu0 0.0
    %309 = vmatpush1.msra.mxu0 %v279
    %310 = vmatprep.subr.mxu0 0.0
    %311 = vmatpush1.msra.mxu0 %v280
    %312 = vmatprep.subr.mxu0 0.0
    %313 = vmatpush1.msra.mxu0 %v281
    %314 = vmatprep.subr.mxu0 0.0
    %315 = vmatpush1.msra.mxu0 0.0
    %316 = vmatprep.subr.mxu0 0.0
    %317 = vmatpush1.msra.mxu0 0.0
    %318 = vmatprep.subr.mxu0 0.0
    %319 = vmatpush1.msra.mxu0 0.0
    %320 = vmatprep.subr.mxu0 0.0
    %321 = vmatpush1.msra.mxu0 0.0
    %322 = vmatprep.subr.mxu0 0.0
    %323 = vmatpush1.msra.mxu0 0.0
    %324 = vmatprep.subr.mxu0 0.0
    %325 = vmatpush1.msra.mxu0 0.0
    %326 = vmatprep.subr.mxu0 0.0
    %327 = vmatpush1.msra.mxu0 0.0
    %328 = vmatprep.subr.mxu0 0.0
    %329 = vmatpush1.msra.mxu0 0.0
    %330 = vmatprep.subr.mxu0 0.0
    %331 = vmatpush1.msra.mxu0 0.0
    %332 = vmatprep.subr.mxu0 0.0
    %333 = vmatpush1.msra.mxu0 0.0
    %334 = vmatprep.subr.mxu0 0.0
    %335 = vmatpush1.msra.mxu0 0.0
    %336 = vmatprep.subr.mxu0 0.0
    %337 = vmatpush1.msra.mxu0 0.0
    %338 = vmatprep.subr.mxu0 0.0
    %339 = vmatpush1.msra.mxu0 0.0
    %340 = vmatprep.subr.mxu0 0.0
    %341 = vmatpush1.msra.mxu0 0.0
    %342 = vmatprep.subr.mxu0 0.0
    %343 = vmatpush1.msra.mxu0 0.0
    %344 = vmatprep.subr.mxu0 0.0
    %345 = vmatpush1.msra.mxu0 0.0
    %346 = vmatprep.mubr.f32.mxu0 0.0
    %347 = vmatmul.mubr.f32.gmra.mrb[0].mxu0 %v263
    %v348 = vpop.f32.mrb[0].mxu0
    %v349 = vadd.f32 0.0, %v348
    %v350 = vpop.f32.mrb[0].mxu0
    %351 = vmatprep.mubr.f32.mxu0 0.0
    %352 = vmatmul.mubr.f32.gmra.mrb[0].mxu0 %v264
    %v353 = vpop.f32.mrb[0].mxu0
    %v354 = vadd.f32 0.0, %v353
    %v355 = vpop.f32.mrb[0].mxu0
    %356 = vdwg.mxu0
    %v357 = vadd.f32 %v255, %v349
    %v358 = vadd.f32 %v260, %v354
    %v359 = vld [vmem:[%s4] sm:$0x1]
    %v361 = vlaneseq
    %v362 = vshrl.u32 %v361, 7
    %v363 = vsub.s32 0, %v362
    %v364 = vrot.slane %v359, %v363
    %v366 = vadd.f32 %v357, %v364
    %v367 = vadd.f32 %v358, %v364
    %368 = vst [vmem:[#allocation10] sm:$0xff] %v366
    %369 = vst [vmem:[#allocation10 + $0x8] sm:$0xff] %v367
    // Predicated region
    $region38: #{tpu_custom_call.1} parent=1 // pred_check
      _
    $region39: #{tpu_custom_call.1} parent=1 // pred_check_branch
      %371 = sbr.rel (0) target = $region41
    $region40: #{tpu_custom_call.1} parent=1 // pred_region
      %s373 = ssub.s32 256, 256
      %374 = vsyncadd [#allocation4], %s373
      %s375 = sshll.u32 [#allocation10], 4
      %s376 = int_to_ptr.vmem [resolvable:$true] %s375
      %381 = dma.vmem_to_hbm [thread:$0]  %s376, 256, %s5, [#allocation4], 128, 128, 8
    $region41: #{tpu_custom_call.1} parent=1 // pred_fallthru
      _
    // Predicated region
    $region42: #{tpu_custom_call.1} parent=1 // pred_check
      _
    $region43: #{tpu_custom_call.1} parent=1 // pred_check_branch
      %383 = sbr.rel (0) target = $region45
    $region44: #{tpu_custom_call.1} parent=1 // pred_region
      %384 = dma.done [#allocation4], 256
    $region45: #{tpu_custom_call.1} parent=1 // pred_fallthru
      _
    %385 = vsyncpa [#allocation3], 1
    %386 = vsyncpa [#allocation6], 1
    %387 = vsyncpa [#allocation9], 1
    %388 = vsyncpa [#allocation4], 1

</llo_original>
